<compile_context>
chip_gen: v7x
topology: tpu7x:2x2x1
jax: 0.10.0
libtpu: 0.0.40
codegen_flags: <defaults>
</compile_context>

<pallas_src>
import functools

import jax
import jax.numpy as jnp
from jax.experimental import pallas as pl
from jax.experimental.pallas import tpu as pltpu


def _round_up(x: int, m: int) -> int:
    return (x + m - 1) // m * m


# ----------------------------- Pallas kernel ------------------------------ #
def _gcn_aggregate_kernel(a_ref, h_ref, scale_ref, b_ref, o_ref, acc_ref, *,
                          ns, tile_k, h_resident):
    """One (row-tile, k-tile) step of   out = leaky_relu(scale * (Aq @ H) + b)."""
    k = pl.program_id(1)

    @pl.when(k == 0)
    def _():
        acc_ref[...] = jnp.zeros_like(acc_ref)

    # int8 A tile -> bf16 (values 0..127 are exact); MXU bf16 x bf16 -> f32 acc.
    a = a_ref[...].astype(jnp.float32).astype(jnp.bfloat16)
    if h_resident:
        start = pl.multiple_of(k * tile_k, tile_k)
        h = h_ref[pl.ds(start, tile_k), :]        # H loaded once, sliced per step
    else:
        h = h_ref[...]                            # streamed H tile
    acc_ref[...] += jnp.dot(a, h, preferred_element_type=jnp.float32)

    @pl.when(k == pl.num_programs(1) - 1)
    def _():
        # per-row dequant scale folded into the epilogue, then bias + leaky_relu
        z = acc_ref[...] * scale_ref[...] + b_ref[...]
        # leaky_relu as max(z, ns*z) -- valid for 0 < ns <= 1 (here ns = 0.5)
        o_ref[...] = jnp.maximum(z, ns * z).astype(o_ref.dtype)


def gcn_aggregate(a_q, h_bf16, a_scale, b_pad, *, ns, tile_rows, tile_k,
                  h_resident):
    """leaky_relu(scale * (Aq @ H) + b) on padded, lane-aligned operands."""
    n_pad = a_q.shape[0]
    d_pad = h_bf16.shape[1]
    grid = (n_pad // tile_rows, n_pad // tile_k)

    if h_resident:
        h_spec = pl.BlockSpec((n_pad, d_pad), lambda i, k: (0, 0))
    else:
        h_spec = pl.BlockSpec((tile_k, d_pad), lambda i, k: (k, 0))

    flops = 2 * n_pad * n_pad * d_pad
    bytes_accessed = (a_q.size + h_bf16.size * 2 + a_scale.size * 4
                      + b_pad.size * 4 + n_pad * d_pad * 2)

    return pl.pallas_call(
        functools.partial(_gcn_aggregate_kernel, ns=ns, tile_k=tile_k,
                          h_resident=h_resident),
        out_shape=jax.ShapeDtypeStruct((n_pad, d_pad), jnp.bfloat16),
        grid_spec=pltpu.PrefetchScalarGridSpec(
            num_scalar_prefetch=0,
            grid=grid,
            in_specs=[
                pl.BlockSpec((tile_rows, tile_k), lambda i, k: (i, k)),  # A int8
                h_spec,                                                  # H bf16
                pl.BlockSpec((tile_rows, 1), lambda i, k: (i, 0)),       # row scale
                pl.BlockSpec((1, d_pad), lambda i, k: (0, 0)),           # bias
            ],
            out_specs=pl.BlockSpec((tile_rows, d_pad), lambda i, k: (i, 0)),
            scratch_shapes=[pltpu.VMEM((tile_rows, d_pad), jnp.float32)],
        ),
        compiler_params=pltpu.CompilerParams(
            dimension_semantics=("parallel", "arbitrary"),
            vmem_limit_bytes=48 * 1024 * 1024,   # safe on v5e/v6e/v7x
        ),
        cost_estimate=pl.CostEstimate(
            flops=flops, transcendentals=0, bytes_accessed=bytes_accessed),
    )(a_q, h_bf16, a_scale, b_pad)


def gcn_layer(a_q, a_scale, x_pad, w_pad, b_pad, *, ns, tile_rows, tile_k,
              h_resident):
    """One fused GCNConv + leaky_relu layer on pre-padded operands."""
    # X @ W hoisted out of the Pallas kernel (its FLOPs are ~C/N of A @ H);
    # w_pad already lane-padded so H comes out at (n_pad, d_pad) directly.
    h = jnp.dot(x_pad, w_pad,
                preferred_element_type=jnp.float32).astype(jnp.bfloat16)
    return gcn_aggregate(a_q, h, a_scale, b_pad, ns=ns, tile_rows=tile_rows,
                         tile_k=tile_k, h_resident=h_resident)


# ------------------------------- glue (JAX) -------------------------------- #
def normalized_adjacency(edge_index, num_nodes, n_pad):
    """Dense GCN-normalized adjacency D^-1/2 (A + I) D^-1/2 at padded size.

    Matches PyG gcn_norm(add_self_loops=True) edge cases: duplicate edges
    accumulate, pre-existing self-loops are replaced by a single weight-1 loop.
    """
    src, dst = edge_index[0], edge_index[1]
    w = jnp.where(src != dst, 1.0, 0.0).astype(jnp.float32)
    a = jnp.zeros((n_pad, n_pad), jnp.float32)
    a = a.at[dst, src].add(w)                       # message j -> i on row i
    diag = jnp.arange(num_nodes)
    a = a.at[diag, diag].add(1.0)                   # weight-1 self loops
    deg = a.sum(axis=1)
    d_inv_sqrt = jnp.where(deg > 0, jax.lax.rsqrt(deg), 0.0)
    return d_inv_sqrt[:, None] * a * d_inv_sqrt[None, :]


def quantize_adjacency(a):
    """Per-row symmetric int8 quantization of the (nonnegative) adjacency."""
    row_max = a.max(axis=1, keepdims=True)
    scale = jnp.where(row_max > 0, row_max / 127.0, 1.0)
    q = jnp.clip(jnp.round(a / scale), 0.0, 127.0).astype(jnp.int8)
    return q, scale.astype(jnp.float32)


def _choose_tiles(n, d_pad):
    """Tile sizes for the A @ H kernel.

    Per-step pipeline overhead is ~0.35us, so tiles are large (hundreds of KiB
    to MiB of A per step) while the double-buffered VMEM footprint stays well
    under the 48 MiB limit (safe on v7x's 64 MiB physical VMEM).
    """
    n_pad = _round_up(max(n, 1), 128)
    if n_pad <= 1024:
        tile_k = n_pad                                   # whole reduction, K axis = 1
        tile_rows = n_pad // 2 if n_pad >= 256 else n_pad  # >=2 row tiles -> megacore
    else:
        n_pad = _round_up(n_pad, 256)
        tile_rows = next(c for c in (1024, 768, 512, 256) if n_pad % c == 0)
        tile_k = next(c for c in (4096, 3072, 2048, 1536, 1024, 768, 512, 256)
                      if n_pad % c == 0)
    # Keep H fully VMEM-resident (loaded once) when its double buffer fits.
    h_resident = 2 * n_pad * d_pad * 2 <= 16 * 1024 * 1024
    return tile_rows, tile_k, n_pad, h_resident


def init_encoder_params(key, in_channels, hidden_channels):
    """Glorot-uniform weights + zero bias (GCNConv.reset_parameters)."""
    dims = [in_channels] + list(hidden_channels)
    params = []
    for i in range(len(hidden_channels)):
        key, sub = jax.random.split(key)
        fan_in, fan_out = dims[i], dims[i + 1]
        limit = jnp.sqrt(6.0 / (fan_in + fan_out))
        w = jax.random.uniform(sub, (fan_in, fan_out), jnp.float32, -limit, limit)
        b = jnp.zeros((1, fan_out), jnp.float32)
        params.append((w, b))
    return params


def encoder_forward(x, edge_index, params, *, ns=0.5):
    """Encoder.forward (adjs=None branch), inference mode.

    F.dropout(training=False) is the identity, so it is omitted.
    """
    # TODO(synk): training-mode dropout (pltpu.prng_random_bits mask) not implemented.
    n, c_in = x.shape
    d_pads = [_round_up(w.shape[1], 128) for w, _ in params]
    tile_rows, tile_k, n_pad, h_resident = _choose_tiles(n, max(d_pads))

    # Quantized normalized adjacency built once, directly at padded size.
    a = normalized_adjacency(edge_index, n, n_pad)
    a_q, a_scale = quantize_adjacency(a)
    del a

    # Pad node rows once; pad each layer's W/b once (zero pad keeps padded
    # channels exactly zero through every layer, so no per-layer re-padding).
    x_pad = jnp.zeros((n_pad, c_in), jnp.float32).at[:n].set(x)
    prev_dim = c_in
    d_out = c_in
    for (w, b), d_pad in zip(params, d_pads):
        d_in, d_out = w.shape
        w_pad = jnp.zeros((prev_dim, d_pad), jnp.float32).at[:d_in, :d_out].set(w)
        b_pad = jnp.zeros((1, d_pad), jnp.float32).at[:, :d_out].set(b)
        x_pad = gcn_layer(a_q, a_scale, x_pad, w_pad, b_pad, ns=ns,
                          tile_rows=tile_rows, tile_k=tile_k,
                          h_resident=h_resident)
        prev_dim = d_pad
    return x_pad[:n, :d_out].astype(jnp.float32)


# ------------------------------ references --------------------------------- #
def encoder_forward_reference_matched(x, edge_index, params, *, ns=0.5):
    """Pure-JAX reference matching the kernel numerics exactly
    (per-row int8 A, bf16 H, f32 MXU accumulation, scale in the epilogue,
    bf16 inter-layer activations)."""
    n = x.shape[0]
    a = normalized_adjacency(edge_index, n, n)
    q, scale = quantize_adjacency(a)
    q_bf16 = q.astype(jnp.float32).astype(jnp.bfloat16)
    xc = x
    for w, b in params:
        h = jnp.dot(xc.astype(jnp.float32), w,
                    preferred_element_type=jnp.float32).astype(jnp.bfloat16)
        z = jnp.dot(q_bf16, h, preferred_element_type=jnp.float32) * scale + b
        xc = jnp.maximum(z, ns * z).astype(jnp.bfloat16)
    return xc.astype(jnp.float32)


def encoder_forward_reference_f32(x, edge_index, params, *, ns=0.5):
    """Full-precision reference of the module semantics."""
    n = x.shape[0]
    a = normalized_adjacency(edge_index, n, n)
    for w, b in params:
        h = a @ (x @ w) + b
        x = jnp.where(h >= 0.0, h, ns * h)
    return x


# --------------------------------- main ------------------------------------ #
if __name__ == "__main__":
    key = jax.random.PRNGKey(0)
    k_x, k_e, k_p = jax.random.split(key, 3)

    num_nodes = 16
    in_channels = 8
    hidden_channels = [32, 16]
    ns = 0.5

    # node features
    x = jax.random.normal(k_x, (num_nodes, in_channels), jnp.float32)

    # random graph: 48 directed edges
    num_edges = 48
    src = jax.random.randint(k_e, (num_edges,), 0, num_nodes)
    dst = jax.random.randint(jax.random.fold_in(k_e, 1), (num_edges,), 0, num_nodes)
    edge_index = jnp.stack([src, dst], axis=0)

    params = init_encoder_params(k_p, in_channels, hidden_channels)

    out = encoder_forward(x, edge_index, params, ns=ns)
    out = jax.block_until_ready(out)
    assert out.shape == (num_nodes, hidden_channels[-1])

    # Tight check vs a reference using identical quantization/precision path.
    ref_matched = encoder_forward_reference_matched(x, edge_index, params, ns=ns)
    assert jnp.allclose(out, ref_matched, atol=1e-2, rtol=1e-2), \
        "mismatch vs numerics-matched JAX reference"

    # Loose check vs the full f32 module semantics (int8-A / bf16 error only).
    ref_f32 = encoder_forward_reference_f32(x, edge_index, params, ns=ns)
    assert jnp.allclose(out, ref_f32, atol=1e-1, rtol=1e-1), \
        "mismatch vs f32 JAX reference"

    print("KERNEL_OK")
</pallas_src>

<mosaic_0001>
module attributes {stable_mosaic.version = 11 : i64} {
  func.func @_gcn_aggregate_kernel(%arg0: i32, %arg1: i32, %arg2: memref<128x128xi8, #tpu.memory_space<vmem>>, %arg3: memref<128x128xbf16, #tpu.memory_space<vmem>>, %arg4: memref<128x1xf32, #tpu.memory_space<vmem>>, %arg5: memref<1x128xf32, #tpu.memory_space<vmem>>, %arg6: memref<128x128xbf16, #tpu.memory_space<vmem>>, %arg7: memref<128x128xf32, #tpu.memory_space<vmem>>) attributes {dimension_semantics = [#tpu.dimension_semantics<parallel>, #tpu.dimension_semantics<arbitrary>], iteration_bounds = array<i64: 1, 1>, scalar_prefetch = 0 : i64, scratch_operands = 1 : i64, tpu.core_type = #tpu.core_type<tc>, window_params = [{transform_indices = @transform_0, window_bounds = array<i64: 128, 128>}, {pipeline_mode = #tpu.pipeline_mode<synchronous>, transform_indices = @transform_1, window_bounds = array<i64: 128, 128>}, {transform_indices = @transform_2, window_bounds = array<i64: 128, 1>}, {pipeline_mode = #tpu.pipeline_mode<synchronous>, transform_indices = @transform_3, window_bounds = array<i64: 1, 128>}, {transform_indices = @transform_4, window_bounds = array<i64: 128, 128>}]} {
    %c0_i32 = arith.constant 0 : i32
    %0 = arith.cmpi eq, %arg1, %c0_i32 : i32
    %1 = arith.extui %0 : i1 to i32
    %c0_i32_0 = arith.constant 0 : i32
    %2 = arith.cmpi ne, %1, %c0_i32_0 : i32
    scf.if %2 {
      %cst_9 = arith.constant 0.000000e+00 : f32
      %17 = vector.broadcast %cst_9 : f32 to vector<128x128xf32>
      %c0_10 = arith.constant 0 : index
      %c0_11 = arith.constant 0 : index
      %18 = vector.load %arg7[%c0_10, %c0_11] : memref<128x128xf32, #tpu.memory_space<vmem>>, vector<128x128xf32>
      tpu.vector_store %arg7[%c0_10, %c0_11], %17 {strides = array<i32>} : memref<128x128xf32, #tpu.memory_space<vmem>>, vector<128x128xf32>,
    } else {
    }
    %c0 = arith.constant 0 : index
    %c0_1 = arith.constant 0 : index
    %3 = vector.load %arg2[%c0, %c0_1] : memref<128x128xi8, #tpu.memory_space<vmem>>, vector<128x128xi8>
    %4 = arith.sitofp %3 : vector<128x128xi8> to vector<128x128xf32>
    %5 = arith.truncf %4 : vector<128x128xf32> to vector<128x128xbf16>
    %c128_i32 = arith.constant 128 : i32
    %6 = arith.muli %arg1, %c128_i32 : i32
    %7 = tpu.assume_multiple %6, 128 : i32
    %8 = arith.index_cast %7 : i32 to index
    %c0_2 = arith.constant 0 : index
    %9 = vector.load %arg3[%8, %c0_2] : memref<128x128xbf16, #tpu.memory_space<vmem>>, vector<128x128xbf16>
    %c0_3 = arith.constant 0 : index
    %c0_4 = arith.constant 0 : index
    %10 = vector.load %arg7[%c0_3, %c0_4] : memref<128x128xf32, #tpu.memory_space<vmem>>, vector<128x128xf32>
    %cst = arith.constant dense<0.000000e+00> : vector<128x128xf32>
    %11 = tpu.matmul %5, %9, %cst {dimension_numbers = #tpu.dot_dimension_numbers<[1], [0], [0], [1], [0, 0, 1, 1], [], []>} : vector<128x128xbf16>, vector<128x128xbf16>, vector<128x128xf32> -> vector<128x128xf32>
    %12 = arith.addf %10, %11 : vector<128x128xf32>
    %c0_5 = arith.constant 0 : index
    %c0_6 = arith.constant 0 : index
    %13 = vector.load %arg7[%c0_5, %c0_6] : memref<128x128xf32, #tpu.memory_space<vmem>>, vector<128x128xf32>
    tpu.vector_store %arg7[%c0_5, %c0_6], %12 {strides = array<i32>} : memref<128x128xf32, #tpu.memory_space<vmem>>, vector<128x128xf32>,
    %c0_i32_7 = arith.constant 0 : i32
    %14 = arith.cmpi eq, %arg1, %c0_i32_7 : i32
    %15 = arith.extui %14 : i1 to i32
    %c0_i32_8 = arith.constant 0 : i32
    %16 = arith.cmpi ne, %15, %c0_i32_8 : i32
    scf.if %16 {
      %c0_9 = arith.constant 0 : index
      %c0_10 = arith.constant 0 : index
      %17 = vector.load %arg7[%c0_9, %c0_10] : memref<128x128xf32, #tpu.memory_space<vmem>>, vector<128x128xf32>
      %c0_11 = arith.constant 0 : index
      %c0_12 = arith.constant 0 : index
      %18 = vector.load %arg4[%c0_11, %c0_12] : memref<128x1xf32, #tpu.memory_space<vmem>>, vector<128x1xf32>
      %19 = vector.broadcast %18 : vector<128x1xf32> to vector<128x128xf32>
      %20 = arith.mulf %17, %19 : vector<128x128xf32>
      %c0_13 = arith.constant 0 : index
      %c0_14 = arith.constant 0 : index
      %21 = vector.load %arg5[%c0_13, %c0_14] : memref<1x128xf32, #tpu.memory_space<vmem>>, vector<1x128xf32>
      %22 = vector.broadcast %21 : vector<1x128xf32> to vector<128x128xf32>
      %23 = arith.addf %20, %22 : vector<128x128xf32>
      %cst_15 = arith.constant 5.000000e-01 : f32
      %24 = vector.broadcast %cst_15 : f32 to vector<128x128xf32>
      %25 = arith.mulf %24, %23 : vector<128x128xf32>
      %26 = arith.maximumf %23, %25 : vector<128x128xf32>
      %27 = arith.truncf %26 : vector<128x128xf32> to vector<128x128xbf16>
      %c0_16 = arith.constant 0 : index
      %c0_17 = arith.constant 0 : index
      %28 = vector.load %arg6[%c0_16, %c0_17] : memref<128x128xbf16, #tpu.memory_space<vmem>>, vector<128x128xbf16>
      tpu.vector_store %arg6[%c0_16, %c0_17], %27 {strides = array<i32>} : memref<128x128xbf16, #tpu.memory_space<vmem>>, vector<128x128xbf16>,
    } else {
    }
    return
  }
  func.func @transform_0(%arg0: i32, %arg1: i32) -> (i32, i32) {
    %c0_i32 = arith.constant 0 : i32
    return %arg0, %arg1 : i32, i32
  }
  func.func @transform_1(%arg0: i32, %arg1: i32) -> (i32, i32) {
    %c0_i32 = arith.constant 0 : i32
    %c0_i32_0 = arith.constant 0 : i32
    %c0_i32_1 = arith.constant 0 : i32
    return %c0_i32, %c0_i32_0 : i32, i32
  }
  func.func @transform_2(%arg0: i32, %arg1: i32) -> (i32, i32) {
    %c0_i32 = arith.constant 0 : i32
    %c0_i32_0 = arith.constant 0 : i32
    return %arg0, %c0_i32 : i32, i32
  }
  func.func @transform_3(%arg0: i32, %arg1: i32) -> (i32, i32) {
    %c0_i32 = arith.constant 0 : i32
    %c0_i32_0 = arith.constant 0 : i32
    %c0_i32_1 = arith.constant 0 : i32
    return %c0_i32, %c0_i32_0 : i32, i32
  }
  func.func @transform_4(%arg0: i32, %arg1: i32) -> (i32, i32) {
    %c0_i32 = arith.constant 0 : i32
    %c0_i32_0 = arith.constant 0 : i32
    return %arg0, %c0_i32 : i32, i32
  }
}

</mosaic_0001>

<llo_original>
// kernel: tpu_custom_call.1
$region0: #{tpu_custom_call.1}
  #allocation0 [shape = 'u32[]', space=smem, size = 0x4, offset = 0x4, fixed_abs, tag = 'smem constant byte address 0x4 - core index']
  #allocation1 [shape = 'u32[144,128]{1,0:T(1,128)}', space=vmem, size = 0x12000, scoped, tag = 'internal scratch']
  #allocation2 [shape = 'f32[128,128]{1,0:T(8,128)}', space=vmem, size = 0x10000, scoped, tag = 'scratch operand']
  %s0 = inlined_call_operand.vmem [shape: s8[128,128], index: 0, kind: input, shape index: {}]
  %s1 = inlined_call_operand.vmem [shape: bf16[128,128], index: 1, kind: input, shape index: {}]
  %s2 = inlined_call_operand.vmem [shape: f32[128,1], index: 2, kind: input, shape index: {}]
  %s3 = inlined_call_operand.vmem [shape: f32[1,128], index: 3, kind: input, shape index: {}]
  %s4 = inlined_call_operand.hbm [shape: bf16[128,128], index: 4, kind: output, shape index: {}]
  %s5 = sld [smem:[#allocation0]]
  $region34: #{tpu_custom_call.1} parent=0
    _
  %s7 = ssub.s32 1, %s5
  %s8 = scalar_select 0, %s7, %s5
  $region1: #{tpu_custom_call.1} parent=0
    #allocation3 [shape = 'u8[32768]{0}', space=vmem, size = 0x8000, scoped, tag = 'output window, operand 0, single buffered']
    #allocation4 [shape = 's32[1]{0}', space=sflag, size = 0x4, scoped, tag = 'scoped memory for tpu_custom_call.1']
    %9 = vsyncpa [#allocation4], 0
    // Predicated region
    $region2: #{tpu_custom_call.1} parent=1 // pred_check
      _
    $region3: #{tpu_custom_call.1} parent=1 // pred_check_branch
      %11 = sbr.rel (0) target = $region5
    $region4: #{tpu_custom_call.1} parent=1 // pred_region
      _
    $region5: #{tpu_custom_call.1} parent=1 // pred_fallthru
      _
    // Predicated region
    $region6: #{tpu_custom_call.1} parent=1 // pred_check
      _
    $region7: #{tpu_custom_call.1} parent=1 // pred_check_branch
      %13 = sbr.rel (0) target = $region9
    $region8: #{tpu_custom_call.1} parent=1 // pred_region
      _
    $region9: #{tpu_custom_call.1} parent=1 // pred_fallthru
      _
    // Predicated region
    $region10: #{tpu_custom_call.1} parent=1 // pred_check
      _
    $region11: #{tpu_custom_call.1} parent=1 // pred_check_branch
      %15 = sbr.rel (0) target = $region13
    $region12: #{tpu_custom_call.1} parent=1 // pred_region
      _
    $region13: #{tpu_custom_call.1} parent=1 // pred_fallthru
      _
    // Predicated region
    $region14: #{tpu_custom_call.1} parent=1 // pred_check
      _
    $region15: #{tpu_custom_call.1} parent=1 // pred_check_branch
      %17 = sbr.rel (0) target = $region17
    $region16: #{tpu_custom_call.1} parent=1 // pred_region
      _
    $region17: #{tpu_custom_call.1} parent=1 // pred_fallthru
      _
    %p19 = scmp.eq.s32.totalorder 0, 0
    // Predicated region
    $region18: #{tpu_custom_call.1} parent=1 // pred_check
      %p20 = pneg %p19
    $region19: #{tpu_custom_call.1} parent=1 // pred_check_branch
      %22 = sbr.rel (%p20) target = $region21
    $region20: #{tpu_custom_call.1} parent=1 // pred_region
      %23 = vst [vmem:[#allocation2] sm:$0xff] 0.0
      %24 = vst [vmem:[#allocation2 + $0x8] sm:$0xff] 0.0
      %25 = vst [vmem:[#allocation2 + $0x10] sm:$0xff] 0.0
      %26 = vst [vmem:[#allocation2 + $0x18] sm:$0xff] 0.0
      %27 = vst [vmem:[#allocation2 + $0x20] sm:$0xff] 0.0
      %28 = vst [vmem:[#allocation2 + $0x28] sm:$0xff] 0.0
      %29 = vst [vmem:[#allocation2 + $0x30] sm:$0xff] 0.0
      %30 = vst [vmem:[#allocation2 + $0x38] sm:$0xff] 0.0
      %31 = vst [vmem:[#allocation2 + $0x40] sm:$0xff] 0.0
      %32 = vst [vmem:[#allocation2 + $0x48] sm:$0xff] 0.0
      %33 = vst [vmem:[#allocation2 + $0x50] sm:$0xff] 0.0
      %34 = vst [vmem:[#allocation2 + $0x58] sm:$0xff] 0.0
      %35 = vst [vmem:[#allocation2 + $0x60] sm:$0xff] 0.0
      %36 = vst [vmem:[#allocation2 + $0x68] sm:$0xff] 0.0
      %37 = vst [vmem:[#allocation2 + $0x70] sm:$0xff] 0.0
      %38 = vst [vmem:[#allocation2 + $0x78] sm:$0xff] 0.0
    $region21: #{tpu_custom_call.1} parent=1 // pred_fallthru
      _
    %v39 = vld [vmem:[%s0] sm:$0xff]
    %v40 = vld [vmem:[%s0 + $0x8] sm:$0xff]
    %v41 = vld [vmem:[%s0 + $0x10] sm:$0xff]
    %v42 = vld [vmem:[%s0 + $0x18] sm:$0xff]
    %v43 = vunpack.c.l.s8.bf16 %v39
    %v44 = vunpack.c.h.s8.bf16 %v39
    %v45 = vunpack.c.l.s8.bf16 %v40
    %v46 = vunpack.c.h.s8.bf16 %v40
    %v47 = vunpack.c.l.s8.bf16 %v41
    %v48 = vunpack.c.h.s8.bf16 %v41
    %v49 = vunpack.c.l.s8.bf16 %v42
    %v50 = vunpack.c.h.s8.bf16 %v42
    %s51 = smul.u32 0, 128
    %s52 = sshra.s32 %s51, 3
    %s53 = sand.u32 %s51, 7
    %s54 = smul.addr %s52, 4
    %s55 = scalar_lea.vmem %s1, %s54
    %v56 = vld [vmem:[%s55] sm:$0xf]
    %v57 = vld [vmem:[%s55 + $0x4] sm:$0xf]
    %v58 = vld [vmem:[%s55 + $0x8] sm:$0xf]
    %v59 = vld [vmem:[%s55 + $0xc] sm:$0xf]
    %v60 = vld [vmem:[%s55 + $0x10] sm:$0xf]
    %v61 = vld [vmem:[%s55 + $0x14] sm:$0xf]
    %v62 = vld [vmem:[%s55 + $0x18] sm:$0xf]
    %v63 = vld [vmem:[%s55 + $0x1c] sm:$0xf]
    %v64 = vld [vmem:[%s55 + $0x20] sm:$0xf]
    %v65 = vld [vmem:[%s55 + $0x24] sm:$0xf]
    %v66 = vld [vmem:[%s55 + $0x28] sm:$0xf]
    %v67 = vld [vmem:[%s55 + $0x2c] sm:$0xf]
    %v68 = vld [vmem:[%s55 + $0x30] sm:$0xf]
    %v69 = vld [vmem:[%s55 + $0x34] sm:$0xf]
    %v70 = vld [vmem:[%s55 + $0x38] sm:$0xf]
    %v71 = vld [vmem:[%s55 + $0x3c] sm:$0xf]
    %v72 = vld [vmem:[#allocation2] sm:$0xff]
    %v73 = vld [vmem:[#allocation2 + $0x8] sm:$0xff]
    %v74 = vld [vmem:[#allocation2 + $0x10] sm:$0xff]
    %v75 = vld [vmem:[#allocation2 + $0x18] sm:$0xff]
    %v76 = vld [vmem:[#allocation2 + $0x20] sm:$0xff]
    %v77 = vld [vmem:[#allocation2 + $0x28] sm:$0xff]
    %v78 = vld [vmem:[#allocation2 + $0x30] sm:$0xff]
    %v79 = vld [vmem:[#allocation2 + $0x38] sm:$0xff]
    %v80 = vld [vmem:[#allocation2 + $0x40] sm:$0xff]
    %v81 = vld [vmem:[#allocation2 + $0x48] sm:$0xff]
    %v82 = vld [vmem:[#allocation2 + $0x50] sm:$0xff]
    %v83 = vld [vmem:[#allocation2 + $0x58] sm:$0xff]
    %v84 = vld [vmem:[#allocation2 + $0x60] sm:$0xff]
    %v85 = vld [vmem:[#allocation2 + $0x68] sm:$0xff]
    %v86 = vld [vmem:[#allocation2 + $0x70] sm:$0xff]
    %v87 = vld [vmem:[#allocation2 + $0x78] sm:$0xff]
    %v104 = vunpack.c.l.b16 %v56
    %v105 = vunpack.c.l.b16 %v57
    %v106 = vunpack.c.l.b16 %v58
    %v107 = vunpack.c.l.b16 %v59
    %v108 = vunpack.c.l.b16 %v60
    %v109 = vunpack.c.l.b16 %v61
    %v110 = vunpack.c.l.b16 %v62
    %v111 = vunpack.c.l.b16 %v63
    %v112 = vunpack.c.l.b16 %v64
    %v113 = vunpack.c.l.b16 %v65
    %v114 = vunpack.c.l.b16 %v66
    %v115 = vunpack.c.l.b16 %v67
    %v116 = vunpack.c.l.b16 %v68
    %v117 = vunpack.c.l.b16 %v69
    %v118 = vunpack.c.l.b16 %v70
    %v119 = vunpack.c.l.b16 %v71
    %v120 = vpack.c.b16 %v105, %v104
    %v121 = vpack.c.b16 %v107, %v106
    %v122 = vpack.c.b16 %v109, %v108
    %v123 = vpack.c.b16 %v111, %v110
    %v124 = vpack.c.b16 %v113, %v112
    %v125 = vpack.c.b16 %v115, %v114
    %v126 = vpack.c.b16 %v117, %v116
    %v127 = vpack.c.b16 %v119, %v118
    %136 = vmatprep.subr.bf16.mxu0 0
    %137 = vmatpush1.bf16.msra.mxu0 %v120
    %138 = vmatprep.subr.bf16.mxu0 0
    %139 = vmatpush1.bf16.msra.mxu0 %v121
    %140 = vmatprep.subr.bf16.mxu0 0
    %141 = vmatpush1.bf16.msra.mxu0 %v122
    %142 = vmatprep.subr.bf16.mxu0 0
    %143 = vmatpush1.bf16.msra.mxu0 %v123
    %144 = vmatprep.subr.bf16.mxu0 0
    %145 = vmatpush1.bf16.msra.mxu0 %v124
    %146 = vmatprep.subr.bf16.mxu0 0
    %147 = vmatpush1.bf16.msra.mxu0 %v125
    %148 = vmatprep.subr.bf16.mxu0 0
    %149 = vmatpush1.bf16.msra.mxu0 %v126
    %150 = vmatprep.subr.bf16.mxu0 0
    %151 = vmatpush1.bf16.msra.mxu0 %v127
    %152 = vmatprep.subr.bf16.mxu0 0
    %153 = vmatpush1.bf16.msra.mxu0 0
    %154 = vmatprep.subr.bf16.mxu0 0
    %155 = vmatpush1.bf16.msra.mxu0 0
    %156 = vmatprep.subr.bf16.mxu0 0
    %157 = vmatpush1.bf16.msra.mxu0 0
    %158 = vmatprep.subr.bf16.mxu0 0
    %159 = vmatpush1.bf16.msra.mxu0 0
    %160 = vmatprep.subr.bf16.mxu0 0
    %161 = vmatpush1.bf16.msra.mxu0 0
    %162 = vmatprep.subr.bf16.mxu0 0
    %163 = vmatpush1.bf16.msra.mxu0 0
    %164 = vmatprep.subr.bf16.mxu0 0
    %165 = vmatpush1.bf16.msra.mxu0 0
    %166 = vmatprep.subr.bf16.mxu0 0
    %167 = vmatpush1.bf16.msra.mxu0 0
    %168 = vmatprep.mubr.bf16.mxu0 0
    %169 = vmatmul.mubr.bf16.gmra.mrb[0].mxu0 %v43
    %v170 = vpop.f32.mrb[0].mxu0
    %v171 = vadd.f32 0.0, %v170
    %v172 = vpop.f32.mrb[0].mxu0
    %v173 = vpop.f32.mrb[0].mxu0
    %v174 = vadd.f32 0.0, %v173
    %v175 = vpop.f32.mrb[0].mxu0
    %176 = vmatprep.mubr.bf16.mxu0 0
    %177 = vmatmul.mubr.bf16.gmra.mrb[0].mxu0 %v44
    %v178 = vpop.f32.mrb[0].mxu0
    %v179 = vadd.f32 0.0, %v178
    %v180 = vpop.f32.mrb[0].mxu0
    %v181 = vpop.f32.mrb[0].mxu0
    %v182 = vadd.f32 0.0, %v181
    %v183 = vpop.f32.mrb[0].mxu0
    %184 = vmatprep.mubr.bf16.mxu0 0
    %185 = vmatmul.mubr.bf16.gmra.mrb[0].mxu0 %v45
    %v186 = vpop.f32.mrb[0].mxu0
    %v187 = vadd.f32 0.0, %v186
    %v188 = vpop.f32.mrb[0].mxu0
    %v189 = vpop.f32.mrb[0].mxu0
    %v190 = vadd.f32 0.0, %v189
    %v191 = vpop.f32.mrb[0].mxu0
    %192 = vmatprep.mubr.bf16.mxu0 0
    %193 = vmatmul.mubr.bf16.gmra.mrb[0].mxu0 %v46
    %v194 = vpop.f32.mrb[0].mxu0
    %v195 = vadd.f32 0.0, %v194
    %v196 = vpop.f32.mrb[0].mxu0
    %v197 = vpop.f32.mrb[0].mxu0
    %v198 = vadd.f32 0.0, %v197
    %v199 = vpop.f32.mrb[0].mxu0
    %200 = vmatprep.mubr.bf16.mxu0 0
    %201 = vmatmul.mubr.bf16.gmra.mrb[0].mxu0 %v47
    %v202 = vpop.f32.mrb[0].mxu0
    %v203 = vadd.f32 0.0, %v202
    %v204 = vpop.f32.mrb[0].mxu0
    %v205 = vpop.f32.mrb[0].mxu0
    %v206 = vadd.f32 0.0, %v205
    %v207 = vpop.f32.mrb[0].mxu0
    %208 = vmatprep.mubr.bf16.mxu0 0
    %209 = vmatmul.mubr.bf16.gmra.mrb[0].mxu0 %v48
    %v210 = vpop.f32.mrb[0].mxu0
    %v211 = vadd.f32 0.0, %v210
    %v212 = vpop.f32.mrb[0].mxu0
    %v213 = vpop.f32.mrb[0].mxu0
    %v214 = vadd.f32 0.0, %v213
    %v215 = vpop.f32.mrb[0].mxu0
    %216 = vmatprep.mubr.bf16.mxu0 0
    %217 = vmatmul.mubr.bf16.gmra.mrb[0].mxu0 %v49
    %v218 = vpop.f32.mrb[0].mxu0
    %v219 = vadd.f32 0.0, %v218
    %v220 = vpop.f32.mrb[0].mxu0
    %v221 = vpop.f32.mrb[0].mxu0
    %v222 = vadd.f32 0.0, %v221
    %v223 = vpop.f32.mrb[0].mxu0
    %224 = vmatprep.mubr.bf16.mxu0 0
    %225 = vmatmul.mubr.bf16.gmra.mrb[0].mxu0 %v50
    %v226 = vpop.f32.mrb[0].mxu0
    %v227 = vadd.f32 0.0, %v226
    %v228 = vpop.f32.mrb[0].mxu0
    %v229 = vpop.f32.mrb[0].mxu0
    %v230 = vadd.f32 0.0, %v229
    %v231 = vpop.f32.mrb[0].mxu0
    %232 = vdwg.mxu0
    %v233 = vadd.f32 %v72, %v171
    %v234 = vadd.f32 %v73, %v174
    %v235 = vadd.f32 %v74, %v179
    %v236 = vadd.f32 %v75, %v182
    %v237 = vadd.f32 %v76, %v187
    %v238 = vadd.f32 %v77, %v190
    %v239 = vadd.f32 %v78, %v195
    %v240 = vadd.f32 %v79, %v198
    %v241 = vadd.f32 %v80, %v203
    %v242 = vadd.f32 %v81, %v206
    %v243 = vadd.f32 %v82, %v211
    %v244 = vadd.f32 %v83, %v214
    %v245 = vadd.f32 %v84, %v219
    %v246 = vadd.f32 %v85, %v222
    %v247 = vadd.f32 %v86, %v227
    %v248 = vadd.f32 %v87, %v230
    %249 = vst [vmem:[#allocation2] sm:$0xff] %v233
    %250 = vst [vmem:[#allocation2 + $0x8] sm:$0xff] %v234
    %251 = vst [vmem:[#allocation2 + $0x10] sm:$0xff] %v235
    %252 = vst [vmem:[#allocation2 + $0x18] sm:$0xff] %v236
    %253 = vst [vmem:[#allocation2 + $0x20] sm:$0xff] %v237
    %254 = vst [vmem:[#allocation2 + $0x28] sm:$0xff] %v238
    %255 = vst [vmem:[#allocation2 + $0x30] sm:$0xff] %v239
    %256 = vst [vmem:[#allocation2 + $0x38] sm:$0xff] %v240
    %257 = vst [vmem:[#allocation2 + $0x40] sm:$0xff] %v241
    %258 = vst [vmem:[#allocation2 + $0x48] sm:$0xff] %v242
    %259 = vst [vmem:[#allocation2 + $0x50] sm:$0xff] %v243
    %260 = vst [vmem:[#allocation2 + $0x58] sm:$0xff] %v244
    %261 = vst [vmem:[#allocation2 + $0x60] sm:$0xff] %v245
    %262 = vst [vmem:[#allocation2 + $0x68] sm:$0xff] %v246
    %263 = vst [vmem:[#allocation2 + $0x70] sm:$0xff] %v247
    %264 = vst [vmem:[#allocation2 + $0x78] sm:$0xff] %v248
    // Predicated region
    $region22: #{tpu_custom_call.1} parent=1 // pred_check
      %p265 = pneg %p19
    $region23: #{tpu_custom_call.1} parent=1 // pred_check_branch
      %267 = sbr.rel (%p265) target = $region25
    $region24: #{tpu_custom_call.1} parent=1 // pred_region
      %v268 = vld [vmem:[#allocation2] sm:$0xff]
      %v269 = vld [vmem:[#allocation2 + $0x8] sm:$0xff]
      %v270 = vld [vmem:[#allocation2 + $0x10] sm:$0xff]
      %v271 = vld [vmem:[#allocation2 + $0x18] sm:$0xff]
      %v272 = vld [vmem:[#allocation2 + $0x20] sm:$0xff]
      %v273 = vld [vmem:[#allocation2 + $0x28] sm:$0xff]
      %v274 = vld [vmem:[#allocation2 + $0x30] sm:$0xff]
      %v275 = vld [vmem:[#allocation2 + $0x38] sm:$0xff]
      %v276 = vld [vmem:[#allocation2 + $0x40] sm:$0xff]
      %v277 = vld [vmem:[#allocation2 + $0x48] sm:$0xff]
      %v278 = vld [vmem:[#allocation2 + $0x50] sm:$0xff]
      %v279 = vld [vmem:[#allocation2 + $0x58] sm:$0xff]
      %v280 = vld [vmem:[#allocation2 + $0x60] sm:$0xff]
      %v281 = vld [vmem:[#allocation2 + $0x68] sm:$0xff]
      %v282 = vld [vmem:[#allocation2 + $0x70] sm:$0xff]
      %v283 = vld [vmem:[#allocation2 + $0x78] sm:$0xff]
      %v284 = vld [vmem:[%s2] sm:$0xff]
      %v285 = vld [vmem:[%s2 + $0x8] sm:$0xff]
      %v286 = vld [vmem:[%s2 + $0x10] sm:$0xff]
      %v287 = vld [vmem:[%s2 + $0x18] sm:$0xff]
      %v288 = vld [vmem:[%s2 + $0x20] sm:$0xff]
      %v289 = vld [vmem:[%s2 + $0x28] sm:$0xff]
      %v290 = vld [vmem:[%s2 + $0x30] sm:$0xff]
      %v291 = vld [vmem:[%s2 + $0x38] sm:$0xff]
      %v292 = vld [vmem:[%s2 + $0x40] sm:$0xff]
      %v293 = vld [vmem:[%s2 + $0x48] sm:$0xff]
      %v294 = vld [vmem:[%s2 + $0x50] sm:$0xff]
      %v295 = vld [vmem:[%s2 + $0x58] sm:$0xff]
      %v296 = vld [vmem:[%s2 + $0x60] sm:$0xff]
      %v297 = vld [vmem:[%s2 + $0x68] sm:$0xff]
      %v298 = vld [vmem:[%s2 + $0x70] sm:$0xff]
      %v299 = vld [vmem:[%s2 + $0x78] sm:$0xff]
      %301 = vset.pattern.permute.xlu0 0
      %302 = vperm.xlu0 %301, %v284
      %v303 = vpop.permute.xlu0 %302
      %306 = vset.pattern.permute.xlu0 0
      %307 = vperm.xlu0 %306, %v285
      %v308 = vpop.permute.xlu0 %307
      %311 = vset.pattern.permute.xlu0 0
      %312 = vperm.xlu0 %311, %v286
      %v313 = vpop.permute.xlu0 %312
      %316 = vset.pattern.permute.xlu0 0
      %317 = vperm.xlu0 %316, %v287
      %v318 = vpop.permute.xlu0 %317
      %321 = vset.pattern.permute.xlu0 0
      %322 = vperm.xlu0 %321, %v288
      %v323 = vpop.permute.xlu0 %322
      %326 = vset.pattern.permute.xlu0 0
      %327 = vperm.xlu0 %326, %v289
      %v328 = vpop.permute.xlu0 %327
      %331 = vset.pattern.permute.xlu0 0
      %332 = vperm.xlu0 %331, %v290
      %v333 = vpop.permute.xlu0 %332
      %336 = vset.pattern.permute.xlu0 0
      %337 = vperm.xlu0 %336, %v291
      %v338 = vpop.permute.xlu0 %337
      %341 = vset.pattern.permute.xlu0 0
      %342 = vperm.xlu0 %341, %v292
      %v343 = vpop.permute.xlu0 %342
      %346 = vset.pattern.permute.xlu0 0
      %347 = vperm.xlu0 %346, %v293
      %v348 = vpop.permute.xlu0 %347
      %351 = vset.pattern.permute.xlu0 0
      %352 = vperm.xlu0 %351, %v294
      %v353 = vpop.permute.xlu0 %352
      %356 = vset.pattern.permute.xlu0 0
      %357 = vperm.xlu0 %356, %v295
      %v358 = vpop.permute.xlu0 %357
      %361 = vset.pattern.permute.xlu0 0
      %362 = vperm.xlu0 %361, %v296
      %v363 = vpop.permute.xlu0 %362
      %366 = vset.pattern.permute.xlu0 0
      %367 = vperm.xlu0 %366, %v297
      %v368 = vpop.permute.xlu0 %367
      %371 = vset.pattern.permute.xlu0 0
      %372 = vperm.xlu0 %371, %v298
      %v373 = vpop.permute.xlu0 %372
      %376 = vset.pattern.permute.xlu0 0
      %377 = vperm.xlu0 %376, %v299
      %v378 = vpop.permute.xlu0 %377
      %v380 = vmul.f32 %v268, %v303
      %v381 = vmul.f32 %v269, %v308
      %v382 = vmul.f32 %v270, %v313
      %v383 = vmul.f32 %v271, %v318
      %v384 = vmul.f32 %v272, %v323
      %v385 = vmul.f32 %v273, %v328
      %v386 = vmul.f32 %v274, %v333
      %v387 = vmul.f32 %v275, %v338
      %v388 = vmul.f32 %v276, %v343
      %v389 = vmul.f32 %v277, %v348
      %v390 = vmul.f32 %v278, %v353
      %v391 = vmul.f32 %v279, %v358
      %v392 = vmul.f32 %v280, %v363
      %v393 = vmul.f32 %v281, %v368
      %v394 = vmul.f32 %v282, %v373
      %v395 = vmul.f32 %v283, %v378
      %v396 = vld [vmem:[%s3] sm:$0x1]
      %v398 = vlaneseq
      %v399 = vshrl.u32 %v398, 7
      %v400 = vsub.s32 0, %v399
      %v401 = vrot.slane %v396, %v400
      %v403 = vadd.f32 %v380, %v401
      %v404 = vadd.f32 %v381, %v401
      %v405 = vadd.f32 %v382, %v401
      %v406 = vadd.f32 %v383, %v401
      %v407 = vadd.f32 %v384, %v401
      %v408 = vadd.f32 %v385, %v401
      %v409 = vadd.f32 %v386, %v401
      %v410 = vadd.f32 %v387, %v401
      %v411 = vadd.f32 %v388, %v401
      %v412 = vadd.f32 %v389, %v401
      %v413 = vadd.f32 %v390, %v401
      %v414 = vadd.f32 %v391, %v401
      %v415 = vadd.f32 %v392, %v401
      %v416 = vadd.f32 %v393, %v401
      %v417 = vadd.f32 %v394, %v401
      %v418 = vadd.f32 %v395, %v401
      %v419 = vmul.f32 %v403, 0.5
      %v420 = vmul.f32 %v404, 0.5
      %v421 = vmul.f32 %v405, 0.5
      %v422 = vmul.f32 %v406, 0.5
      %v423 = vmul.f32 %v407, 0.5
      %v424 = vmul.f32 %v408, 0.5
      %v425 = vmul.f32 %v409, 0.5
      %v426 = vmul.f32 %v410, 0.5
      %v427 = vmul.f32 %v411, 0.5
      %v428 = vmul.f32 %v412, 0.5
      %v429 = vmul.f32 %v413, 0.5
      %v430 = vmul.f32 %v414, 0.5
      %v431 = vmul.f32 %v415, 0.5
      %v432 = vmul.f32 %v416, 0.5
      %v433 = vmul.f32 %v417, 0.5
      %v434 = vmul.f32 %v418, 0.5
      %v435 = vmax.f32 %v403, %v419
      %v436 = vmax.f32 %v404, %v420
      %v437 = vmax.f32 %v405, %v421
      %v438 = vmax.f32 %v406, %v422
      %v439 = vmax.f32 %v407, %v423
      %v440 = vmax.f32 %v408, %v424
      %v441 = vmax.f32 %v409, %v425
      %v442 = vmax.f32 %v410, %v426
      %v443 = vmax.f32 %v411, %v427
      %v444 = vmax.f32 %v412, %v428
      %v445 = vmax.f32 %v413, %v429
      %v446 = vmax.f32 %v414, %v430
      %v447 = vmax.f32 %v415, %v431
      %v448 = vmax.f32 %v416, %v432
      %v449 = vmax.f32 %v417, %v433
      %v450 = vmax.f32 %v418, %v434
      %v451 = vpack.c.bf16 %v436, %v435
      %v452 = vpack.c.bf16 %v438, %v437
      %v453 = vpack.c.bf16 %v440, %v439
      %v454 = vpack.c.bf16 %v442, %v441
      %v455 = vpack.c.bf16 %v444, %v443
      %v456 = vpack.c.bf16 %v446, %v445
      %v457 = vpack.c.bf16 %v448, %v447
      %v458 = vpack.c.bf16 %v450, %v449
      %v467 = vunpack.c.l.b16 %v451
      %v468 = vunpack.c.h.b16 %v451
      %v469 = vunpack.c.l.b16 %v452
      %v470 = vunpack.c.h.b16 %v452
      %v471 = vunpack.c.l.b16 %v453
      %v472 = vunpack.c.h.b16 %v453
      %v473 = vunpack.c.l.b16 %v454
      %v474 = vunpack.c.h.b16 %v454
      %v475 = vunpack.c.l.b16 %v455
      %v476 = vunpack.c.h.b16 %v455
      %v477 = vunpack.c.l.b16 %v456
      %v478 = vunpack.c.h.b16 %v456
      %v479 = vunpack.c.l.b16 %v457
      %v480 = vunpack.c.h.b16 %v457
      %v481 = vunpack.c.l.b16 %v458
      %v482 = vunpack.c.h.b16 %v458
      %v483 = vpack.c.b16 %v467, %v467
      %v484 = vpack.c.b16 %v468, %v468
      %v485 = vpack.c.b16 %v469, %v469
      %v486 = vpack.c.b16 %v470, %v470
      %v487 = vpack.c.b16 %v471, %v471
      %v488 = vpack.c.b16 %v472, %v472
      %v489 = vpack.c.b16 %v473, %v473
      %v490 = vpack.c.b16 %v474, %v474
      %v491 = vpack.c.b16 %v475, %v475
      %v492 = vpack.c.b16 %v476, %v476
      %v493 = vpack.c.b16 %v477, %v477
      %v494 = vpack.c.b16 %v478, %v478
      %v495 = vpack.c.b16 %v479, %v479
      %v496 = vpack.c.b16 %v480, %v480
      %v497 = vpack.c.b16 %v481, %v481
      %v498 = vpack.c.b16 %v482, %v482
      %515 = vst [vmem:[#allocation3] sm:$0xf] %v483
      %516 = vst [vmem:[#allocation3 + $0x4] sm:$0xf] %v484
      %517 = vst [vmem:[#allocation3 + $0x8] sm:$0xf] %v485
      %518 = vst [vmem:[#allocation3 + $0xc] sm:$0xf] %v486
      %519 = vst [vmem:[#allocation3 + $0x10] sm:$0xf] %v487
      %520 = vst [vmem:[#allocation3 + $0x14] sm:$0xf] %v488
      %521 = vst [vmem:[#allocation3 + $0x18] sm:$0xf] %v489
      %522 = vst [vmem:[#allocation3 + $0x1c] sm:$0xf] %v490
      %523 = vst [vmem:[#allocation3 + $0x20] sm:$0xf] %v491
      %524 = vst [vmem:[#allocation3 + $0x24] sm:$0xf] %v492
      %525 = vst [vmem:[#allocation3 + $0x28] sm:$0xf] %v493
      %526 = vst [vmem:[#allocation3 + $0x2c] sm:$0xf] %v494
      %527 = vst [vmem:[#allocation3 + $0x30] sm:$0xf] %v495
      %528 = vst [vmem:[#allocation3 + $0x34] sm:$0xf] %v496
      %529 = vst [vmem:[#allocation3 + $0x38] sm:$0xf] %v497
      %530 = vst [vmem:[#allocation3 + $0x3c] sm:$0xf] %v498
    $region25: #{tpu_custom_call.1} parent=1 // pred_fallthru
      _
    // Predicated region
    $region26: #{tpu_custom_call.1} parent=1 // pred_check
      _
    $region27: #{tpu_custom_call.1} parent=1 // pred_check_branch
      %532 = sbr.rel (0) target = $region29
    $region28: #{tpu_custom_call.1} parent=1 // pred_region
      %s534 = ssub.s32 1024, 1024
      %535 = vsyncadd [#allocation4], %s534
      %s536 = sshll.u32 [#allocation3], 4
      %s537 = int_to_ptr.vmem [resolvable:$true] %s536
      %542 = dma.vmem_to_hbm [thread:$0]  %s537, 1024, %s4, [#allocation4], 64, 64, 4
    $region29: #{tpu_custom_call.1} parent=1 // pred_fallthru
      _
    // Predicated region
    $region30: #{tpu_custom_call.1} parent=1 // pred_check
      _
    $region31: #{tpu_custom_call.1} parent=1 // pred_check_branch
      %544 = sbr.rel (0) target = $region33
    $region32: #{tpu_custom_call.1} parent=1 // pred_region
      %545 = dma.done [#allocation4], 1024
    $region33: #{tpu_custom_call.1} parent=1 // pred_fallthru
      _
    %546 = vsyncpa [#allocation4], 1

</llo_original>
